<compile_context>
chip_gen: v7x
topology: tpu7x:2x2x1
jax: 0.10.0
libtpu: 0.0.40
codegen_flags: <defaults>
</compile_context>

<pallas_src>
import functools

import jax
import jax.numpy as jnp
from jax.experimental import pallas as pl
from jax.experimental.pallas import tpu as pltpu


def _round_up(x, m):
    return ((x + m - 1) // m) * m


def _pick_row_tile(n_rows, cap=256):
    """Row tile: multiple of 8; prefer one that divides n_rows (no padding)."""
    if n_rows <= cap:
        return _round_up(n_rows, 8)
    for tn in range(cap, 7, -8):
        if n_rows % tn == 0:
            return tn
    return cap  # fall back to padded rows


def _pick_reduction_tile(length, cap=2048):
    """Reduction tile: multiple of 128; prefer one that divides length."""
    if length <= cap:
        return _round_up(length, 128)
    for tl in range(cap, 127, -128):
        if length % tl == 0:
            return tl
    return cap  # fall back to padded reduction axis (zeros are harmless)


def _std_kernel(x_ref, o_ref, s_ref, ss_ref, *, n_valid):
    """Accumulate sum / sumsq over reduction tiles; finalize std on last tile.

    x_ref : (tn, tl) block of rows (zero-padded beyond n_valid columns).
    o_ref : (tn, 1) per-row std (written only on the last reduction step).
    s_ref, ss_ref : (tn, 1) f32 VMEM accumulators, persistent across the grid.
    """
    l = pl.program_id(1)

    @pl.when(l == 0)
    def _():
        s_ref[...] = jnp.zeros_like(s_ref)
        ss_ref[...] = jnp.zeros_like(ss_ref)

    # Single read of the tile; fused sum and sum-of-squares (f32 accumulation).
    x = x_ref[...].astype(jnp.float32)
    s_ref[...] += jnp.sum(x, axis=-1, keepdims=True)
    ss_ref[...] += jnp.sum(x * x, axis=-1, keepdims=True)

    @pl.when(l == pl.num_programs(1) - 1)
    def _():
        s = s_ref[...]
        ss = ss_ref[...]
        # Unbiased variance (Bessel, ddof=1) like torch.Tensor.std().
        # Note: n_valid == 1 yields NaN, matching PyTorch.
        inv_n = 1.0 / n_valid
        inv_nm1 = 1.0 / (n_valid - 1)
        var = (ss - s * s * inv_n) * inv_nm1
        # Fused one-pass formula can go slightly negative from cancellation.
        var = jnp.maximum(var, 0.0)
        o_ref[...] = jnp.sqrt(var).astype(o_ref.dtype)


def std_pool(x, *, row_tile_cap=256, red_tile_cap=2048):
    """x: (B, C, H, W) -> (B, C, 1, 1) per-channel spatial std (unbiased)."""
    b, c, h, w = x.shape
    n_rows = b * c
    length = h * w
    x2 = x.reshape(n_rows, length)

    tn = _pick_row_tile(n_rows, row_tile_cap)
    tl = _pick_reduction_tile(length, red_tile_cap)

    pad_rows = _round_up(n_rows, tn) - n_rows
    pad_cols = _round_up(length, tl) - length
    if pad_rows or pad_cols:
        # Zero padding does not perturb sum / sumsq; padded rows are sliced off.
        x2 = jnp.pad(x2, ((0, pad_rows), (0, pad_cols)))
    rows_p, cols_p = x2.shape

    grid = (rows_p // tn, cols_p // tl)

    out = pl.pallas_call(
        functools.partial(_std_kernel, n_valid=length),
        out_shape=jax.ShapeDtypeStruct((rows_p, 1), x.dtype),
        grid_spec=pltpu.PrefetchScalarGridSpec(
            num_scalar_prefetch=0,
            grid=grid,
            in_specs=[pl.BlockSpec((tn, tl), lambda i, l: (i, l))],
            out_specs=pl.BlockSpec((tn, 1), lambda i, l: (i, 0)),
            scratch_shapes=[
                pltpu.VMEM((tn, 1), jnp.float32),  # running sum
                pltpu.VMEM((tn, 1), jnp.float32),  # running sum of squares
            ],
        ),
        compiler_params=pltpu.CompilerParams(
            # Rows are independent (shards across v7x's 2 TCs);
            # reduction axis carries the accumulator, so "arbitrary" and last.
            dimension_semantics=("parallel", "arbitrary"),
        ),
    )(x2)

    return out[:n_rows].reshape(b, c, 1, 1)


if __name__ == "__main__":
    key = jax.random.PRNGKey(0)
    # Small shapes consistent with the module's forward (NCHW).
    B, C, H, W = 2, 4, 16, 16
    x = jax.random.uniform(key, (B, C, H, W), dtype=jnp.float32)

    out = std_pool(x)
    jax.block_until_ready(out)

    # Reference: unbiased std over spatial dims (PyTorch .std default ddof=1).
    ref = jnp.std(x.reshape(B, C, -1), axis=2, ddof=1).reshape(B, C, 1, 1)
    assert out.shape == (B, C, 1, 1), out.shape
    assert jnp.allclose(out, ref, atol=1e-5, rtol=1e-5), (
        float(jnp.max(jnp.abs(out - ref)))
    )
    print("KERNEL_OK")
</pallas_src>

<mosaic_0001>
module attributes {stable_mosaic.version = 11 : i64} {
  func.func @_std_kernel(%arg0: i32, %arg1: i32, %arg2: memref<8x256xf32, #tpu.memory_space<vmem>>, %arg3: memref<8x1xf32, #tpu.memory_space<vmem>>, %arg4: memref<8x1xf32, #tpu.memory_space<vmem>>, %arg5: memref<8x1xf32, #tpu.memory_space<vmem>>) attributes {dimension_semantics = [#tpu.dimension_semantics<parallel>, #tpu.dimension_semantics<arbitrary>], iteration_bounds = array<i64: 1, 1>, scalar_prefetch = 0 : i64, scratch_operands = 2 : i64, tpu.core_type = #tpu.core_type<tc>, window_params = [{transform_indices = @transform_0, window_bounds = array<i64: 8, 256>}, {transform_indices = @transform_1, window_bounds = array<i64: 8, 1>}]} {
    %c0_i32 = arith.constant 0 : i32
    %0 = arith.cmpi eq, %arg1, %c0_i32 : i32
    %1 = arith.extui %0 : i1 to i32
    %c0_i32_0 = arith.constant 0 : i32
    %2 = arith.cmpi ne, %1, %c0_i32_0 : i32
    scf.if %2 {
      %cst_13 = arith.constant 0.000000e+00 : f32
      %18 = vector.broadcast %cst_13 : f32 to vector<8x1xf32>
      %c0_14 = arith.constant 0 : index
      %c0_15 = arith.constant 0 : index
      %19 = vector.load %arg4[%c0_14, %c0_15] : memref<8x1xf32, #tpu.memory_space<vmem>>, vector<8x1xf32>
      tpu.vector_store %arg4[%c0_14, %c0_15], %18 {strides = array<i32>} : memref<8x1xf32, #tpu.memory_space<vmem>>, vector<8x1xf32>,
      %cst_16 = arith.constant 0.000000e+00 : f32
      %20 = vector.broadcast %cst_16 : f32 to vector<8x1xf32>
      %c0_17 = arith.constant 0 : index
      %c0_18 = arith.constant 0 : index
      %21 = vector.load %arg5[%c0_17, %c0_18] : memref<8x1xf32, #tpu.memory_space<vmem>>, vector<8x1xf32>
      tpu.vector_store %arg5[%c0_17, %c0_18], %20 {strides = array<i32>} : memref<8x1xf32, #tpu.memory_space<vmem>>, vector<8x1xf32>,
    } else {
    }
    %c0 = arith.constant 0 : index
    %c0_1 = arith.constant 0 : index
    %3 = vector.load %arg2[%c0, %c0_1] : memref<8x256xf32, #tpu.memory_space<vmem>>, vector<8x256xf32>
    %c0_2 = arith.constant 0 : index
    %c0_3 = arith.constant 0 : index
    %4 = vector.load %arg4[%c0_2, %c0_3] : memref<8x1xf32, #tpu.memory_space<vmem>>, vector<8x1xf32>
    %cst = arith.constant dense<0.000000e+00> : vector<8xf32>
    %5 = vector.multi_reduction <add>, %3, %cst [1] : vector<8x256xf32> to vector<8xf32>
    %6 = vector.shape_cast %5 : vector<8xf32> to vector<8x1xf32>
    %7 = arith.addf %4, %6 : vector<8x1xf32>
    %c0_4 = arith.constant 0 : index
    %c0_5 = arith.constant 0 : index
    %8 = vector.load %arg4[%c0_4, %c0_5] : memref<8x1xf32, #tpu.memory_space<vmem>>, vector<8x1xf32>
    tpu.vector_store %arg4[%c0_4, %c0_5], %7 {strides = array<i32>} : memref<8x1xf32, #tpu.memory_space<vmem>>, vector<8x1xf32>,
    %c0_6 = arith.constant 0 : index
    %c0_7 = arith.constant 0 : index
    %9 = vector.load %arg5[%c0_6, %c0_7] : memref<8x1xf32, #tpu.memory_space<vmem>>, vector<8x1xf32>
    %10 = arith.mulf %3, %3 : vector<8x256xf32>
    %cst_8 = arith.constant dense<0.000000e+00> : vector<8xf32>
    %11 = vector.multi_reduction <add>, %10, %cst_8 [1] : vector<8x256xf32> to vector<8xf32>
    %12 = vector.shape_cast %11 : vector<8xf32> to vector<8x1xf32>
    %13 = arith.addf %9, %12 : vector<8x1xf32>
    %c0_9 = arith.constant 0 : index
    %c0_10 = arith.constant 0 : index
    %14 = vector.load %arg5[%c0_9, %c0_10] : memref<8x1xf32, #tpu.memory_space<vmem>>, vector<8x1xf32>
    tpu.vector_store %arg5[%c0_9, %c0_10], %13 {strides = array<i32>} : memref<8x1xf32, #tpu.memory_space<vmem>>, vector<8x1xf32>,
    %c0_i32_11 = arith.constant 0 : i32
    %15 = arith.cmpi eq, %arg1, %c0_i32_11 : i32
    %16 = arith.extui %15 : i1 to i32
    %c0_i32_12 = arith.constant 0 : i32
    %17 = arith.cmpi ne, %16, %c0_i32_12 : i32
    scf.if %17 {
      %c0_13 = arith.constant 0 : index
      %c0_14 = arith.constant 0 : index
      %18 = vector.load %arg4[%c0_13, %c0_14] : memref<8x1xf32, #tpu.memory_space<vmem>>, vector<8x1xf32>
      %c0_15 = arith.constant 0 : index
      %c0_16 = arith.constant 0 : index
      %19 = vector.load %arg5[%c0_15, %c0_16] : memref<8x1xf32, #tpu.memory_space<vmem>>, vector<8x1xf32>
      %20 = arith.mulf %18, %18 : vector<8x1xf32>
      %cst_17 = arith.constant 3.906250e-03 : f32
      %21 = vector.broadcast %cst_17 : f32 to vector<8x1xf32>
      %22 = arith.mulf %20, %21 : vector<8x1xf32>
      %23 = arith.subf %19, %22 : vector<8x1xf32>
      %cst_18 = arith.constant 0.00392156886 : f32
      %24 = vector.broadcast %cst_18 : f32 to vector<8x1xf32>
      %25 = arith.mulf %23, %24 : vector<8x1xf32>
      %cst_19 = arith.constant 0.000000e+00 : f32
      %26 = vector.broadcast %cst_19 : f32 to vector<8x1xf32>
      %27 = arith.maximumf %25, %26 : vector<8x1xf32>
      %28 = math.sqrt %27 : vector<8x1xf32>
      %c0_20 = arith.constant 0 : index
      %c0_21 = arith.constant 0 : index
      %29 = vector.load %arg3[%c0_20, %c0_21] : memref<8x1xf32, #tpu.memory_space<vmem>>, vector<8x1xf32>
      tpu.vector_store %arg3[%c0_20, %c0_21], %28 {strides = array<i32>} : memref<8x1xf32, #tpu.memory_space<vmem>>, vector<8x1xf32>,
    } else {
    }
    return
  }
  func.func @transform_0(%arg0: i32, %arg1: i32) -> (i32, i32) {
    %c0_i32 = arith.constant 0 : i32
    return %arg0, %arg1 : i32, i32
  }
  func.func @transform_1(%arg0: i32, %arg1: i32) -> (i32, i32) {
    %c0_i32 = arith.constant 0 : i32
    %c0_i32_0 = arith.constant 0 : i32
    return %arg0, %c0_i32 : i32, i32
  }
}

</mosaic_0001>

<llo_original>
// kernel: tpu_custom_call.1
$region0: #{tpu_custom_call.1}
  #allocation0 [shape = 'u32[]', space=smem, size = 0x4, offset = 0x4, fixed_abs, tag = 'smem constant byte address 0x4 - core index']
  #allocation1 [shape = 'u32[144,128]{1,0:T(1,128)}', space=vmem, size = 0x12000, scoped, tag = 'internal scratch']
  #allocation2 [shape = 'f32[8,1]{1,0:T(8,128)}', space=vmem, size = 0x1000, scoped, tag = 'scratch operand']
  #allocation3 [shape = 'f32[8,1]{1,0:T(8,128)}', space=vmem, size = 0x1000, scoped, tag = 'scratch operand']
  %s0 = inlined_call_operand.hbm [shape: f32[8,256], index: 0, kind: input, shape index: {}]
  %s1 = inlined_call_operand.vmem [shape: f32[8,1], index: 1, kind: output, shape index: {}]
  %s2 = sld [smem:[#allocation0]]
  $region26: #{tpu_custom_call.1} parent=0
    _
  %s4 = ssub.s32 1, %s2
  %s5 = scalar_select 0, %s4, %s2
  $region1: #{tpu_custom_call.1} parent=0
    #allocation4 [shape = 'u8[8192]{0}', space=vmem, size = 0x2000, scoped, tag = 'input window, operand 0, single buffered']
    #allocation5 [shape = 's32[1]{0}', space=sflag, size = 0x4, scoped, tag = 'scoped memory for tpu_custom_call.1']
    %6 = vsyncpa [#allocation5], 0
    // Predicated region
    $region2: #{tpu_custom_call.1} parent=1 // pred_check
      _
    $region3: #{tpu_custom_call.1} parent=1 // pred_check_branch
      %8 = sbr.rel (0) target = $region5
    $region4: #{tpu_custom_call.1} parent=1 // pred_region
      %s10 = ssub.s32 256, 256
      %11 = vsyncadd [#allocation5], %s10
      %s13 = sshll.u32 [#allocation4], 4
      %s14 = int_to_ptr.vmem [resolvable:$true] %s13
      %16 = dma.hbm_to_vmem [thread:$0]  %s0, 256, %s14, [#allocation5]
    $region5: #{tpu_custom_call.1} parent=1 // pred_fallthru
      _
    // Predicated region
    $region6: #{tpu_custom_call.1} parent=1 // pred_check
      _
    $region7: #{tpu_custom_call.1} parent=1 // pred_check_branch
      %18 = sbr.rel (0) target = $region9
    $region8: #{tpu_custom_call.1} parent=1 // pred_region
      %19 = dma.done [#allocation5], 256
    $region9: #{tpu_custom_call.1} parent=1 // pred_fallthru
      _
    %p20 = scmp.eq.s32.totalorder 0, 0
    // Predicated region
    $region10: #{tpu_custom_call.1} parent=1 // pred_check
      %p21 = pneg %p20
    $region11: #{tpu_custom_call.1} parent=1 // pred_check_branch
      %23 = sbr.rel (%p21) target = $region13
    $region12: #{tpu_custom_call.1} parent=1 // pred_region
      %vm24 = vcmask 7168
      %25 = vst.msk [vmem:[#allocation2] sm:$0xff] %vm24, 0.0
      %26 = vst.msk [vmem:[#allocation3] sm:$0xff] %vm24, 0.0
    $region13: #{tpu_custom_call.1} parent=1 // pred_fallthru
      _
    %v27 = vld [vmem:[#allocation4] sm:$0xff]
    %v28 = vld [vmem:[#allocation4 + $0x8] sm:$0xff]
    %v29 = vld [vmem:[#allocation2] sm:$0xff]
    %v30 = vadd.f32 %v27, %v28
    %31 = vadd.xlane.f32.xlu0 %v30
    %v32 = vpop.xlane.xlu0 %31
    %v33 = vadd.f32 %v29, %v32
    %vm34 = vcmask 7168
    %35 = vst.msk [vmem:[#allocation2] sm:$0xff] %vm34, %v33
    %v36 = vld [vmem:[#allocation3] sm:$0xff]
    %v37 = vmul.f32 %v27, %v27
    %v38 = vmul.f32 %v28, %v28
    %v39 = vadd.f32 %v37, %v38
    %40 = vadd.xlane.f32.xlu0 %v39
    %v41 = vpop.xlane.xlu0 %40
    %v42 = vadd.f32 %v36, %v41
    %43 = vst.msk [vmem:[#allocation3] sm:$0xff] %vm34, %v42
    // Predicated region
    $region14: #{tpu_custom_call.1} parent=1 // pred_check
      %p44 = pneg %p20
    $region15: #{tpu_custom_call.1} parent=1 // pred_check_branch
      %46 = sbr.rel (%p44) target = $region17
    $region16: #{tpu_custom_call.1} parent=1 // pred_region
      %v47 = vld [vmem:[#allocation2] sm:$0xff]
      %v48 = vld [vmem:[#allocation3] sm:$0xff]
      %v49 = vmul.f32 %v47, %v47
      %v50 = vmul.f32 %v49, 0.00390625
      %v51 = vsub.f32 %v48, %v50
      %v52 = vmul.f32 %v51, 0.003921569
      %v53 = vmax.f32 %v52, 0.0
      %v54 = vrsqrt.pop %v53
      %v55 = vmul.f32 %v53, %v54
      %vm56 = vcmp.eq.f32.partialorder %v53, inf
      %v57 = vsel %vm56, %v53, %v55
      %vm58 = vcmp.eq.f32.partialorder %v53, 0.0
      %v59 = vand.u32 %v53, 2147483648
      %v60 = vsel %vm58, %v59, %v57
      %61 = vst.msk [vmem:[%s1] sm:$0xff] %vm34, %v60
    $region17: #{tpu_custom_call.1} parent=1 // pred_fallthru
      _
    // Predicated region
    $region18: #{tpu_custom_call.1} parent=1 // pred_check
      _
    $region19: #{tpu_custom_call.1} parent=1 // pred_check_branch
      %63 = sbr.rel (0) target = $region21
    $region20: #{tpu_custom_call.1} parent=1 // pred_region
      _
    $region21: #{tpu_custom_call.1} parent=1 // pred_fallthru
      _
    // Predicated region
    $region22: #{tpu_custom_call.1} parent=1 // pred_check
      _
    $region23: #{tpu_custom_call.1} parent=1 // pred_check_branch
      %65 = sbr.rel (0) target = $region25
    $region24: #{tpu_custom_call.1} parent=1 // pred_region
      _
    $region25: #{tpu_custom_call.1} parent=1 // pred_fallthru
      _
    %66 = vsyncpa [#allocation5], 1

</llo_original>
